<compile_context>
chip_gen: v7x
topology: tpu7x:2x2x1
jax: 0.10.0
libtpu: 0.0.40
codegen_flags: <defaults>
</compile_context>

<pallas_src>
import functools
import math

import numpy as np
import jax
import jax.numpy as jnp
from jax.experimental import pallas as pl
from jax.experimental.pallas import tpu as pltpu

SCATTERING_WINDOW_SIZE = 64
WIN = SCATTERING_WINDOW_SIZE
HOP = WIN // 2          # 32
NBINS = WIN // 2 + 1    # 33 rfft bins
PADB = 64               # lane-padded bin group inside the matmul output


def _build_dft_matrix():
    """Fused real-DFT matrix for the hop decomposition, shape (HOP, 4*PADB).

    Lane groups (64 lanes each, only the first NBINS are non-zero):
      [  0: 64)  cos, window samples  0..31 (top half of a frame)
      [ 64:128)  sin, window samples  0..31
      [128:192)  cos, window samples 32..63 (bottom half of a frame)
      [192:256)  sin, window samples 32..63
    All with 'ortho' normalization 1/sqrt(WIN).
    """
    n = np.arange(WIN, dtype=np.float64)[:, None]
    k = np.arange(NBINS, dtype=np.float64)[None, :]
    ang = 2.0 * np.pi * n * k / WIN
    scale = 1.0 / np.sqrt(WIN)
    cos_m = np.cos(ang) * scale          # (WIN, NBINS)
    sin_m = np.sin(ang) * scale
    m = np.zeros((HOP, 4 * PADB), dtype=np.float32)
    m[:, 0 * PADB:0 * PADB + NBINS] = cos_m[:HOP]
    m[:, 1 * PADB:1 * PADB + NBINS] = sin_m[:HOP]
    m[:, 2 * PADB:2 * PADB + NBINS] = cos_m[HOP:]
    m[:, 3 * PADB:3 * PADB + NBINS] = sin_m[HOP:]
    return jnp.asarray(m)


def _scattering_kernel(h_ref, m_ref, o_ref, *, rows, n_hops):
    # h_ref: (rows * n_hops, HOP)     non-overlapping hop blocks of `rows` signals
    # m_ref: (HOP, 4 * PADB)          fused cos/sin DFT matrix (top & bottom halves)
    # o_ref: (rows, n_hops + 1, NBINS) final magnitudes (no padded bins in HBM)

    def mag(z):
        # z: (rows, f, 2*PADB) = [re (64 lanes) | im (64 lanes)]
        re = z[:, :, :NBINS]
        im = z[:, :, PADB:PADB + NBINS]
        return jnp.sqrt(re * re + im * im)

    # One MXU matmul: partial DFTs of every 32-sample hop block.
    p = jnp.dot(h_ref[...], m_ref[...], preferred_element_type=jnp.float32)
    p = p.reshape(rows, n_hops, 4 * PADB)

    # Frame f spans hop blocks (f, f+1): top half from hop f, bottom half from
    # hop f+1.  The shift-by-one-hop is two sublane-offset value slices + one
    # add (no concatenates, no materialized zero blocks).
    if n_hops > 1:
        z_main = p[:, :n_hops - 1, :2 * PADB] + p[:, 1:, 2 * PADB:]
        o_ref[:, pl.ds(0, n_hops - 1), :] = mag(z_main)
    # Frame n_hops-1: its bottom half is the first pad hop block (all zero).
    z_last = p[:, n_hops - 1:, :2 * PADB]
    o_ref[:, pl.ds(n_hops - 1, 1), :] = mag(z_last)
    # Frame n_hops covers only pad samples -> exactly zero, no compute needed.
    o_ref[:, pl.ds(n_hops, 1), :] = jnp.zeros((rows, 1, NBINS), jnp.float32)


def _pick_rows(N, n_hops):
    """Signals (rows) per grid step.

    Target rows*n_hops ~ TARGET_M hop blocks (~1 MiB in+out per step) while
    keeping >= MIN_STEPS grid steps when there is enough work (software
    pipelining + both v7x TensorCores), never shrinking a step below MIN_M hop
    blocks just to add steps.
    """
    TARGET_M = 4096
    MIN_M = 1024
    MIN_STEPS = 8
    rows_big = max(1, TARGET_M // max(n_hops, 1))
    rows_steps = max(1, pl.cdiv(N, MIN_STEPS))
    rows_floor = max(1, MIN_M // max(n_hops, 1))
    rows = max(1, min(N, rows_big, max(rows_steps, rows_floor)))
    # Keep the input block's second-minor dim (rows * n_hops) 8-aligned so the
    # BlockSpec and the in-kernel leading-dim reshape stay on the fast path.
    align = 8 // math.gcd(n_hops, 8)
    if rows % align != 0:
        rows = (rows // align) * align
        if rows == 0:
            rows = N   # full-array block is always a legal BlockSpec
    return max(1, min(rows, N))


def scattering(x):
    """x: (B, C, T) float32 with T % 32 == 0 -> (B, C, T//32 + 1, 33) float32."""
    B, C, T = x.shape
    # TODO(synk): support T not a multiple of 32 (PyTorch unfold handles
    # arbitrary T); callers here use hop-aligned signals.
    assert T % HOP == 0, "kernel requires T to be a multiple of 32"
    N = B * C
    n_hops = T // HOP
    n_frames = n_hops + 1

    # Contiguous (zero-copy) relabelling into non-overlapping hop blocks.
    x_rows = x.astype(jnp.float32).reshape(N * n_hops, HOP)
    dft = _build_dft_matrix()

    rows = _pick_rows(N, n_hops)
    grid = (pl.cdiv(N, rows),)   # edge block (if any) is masked by Pallas
    # NOTE: for very long signals (n_hops >~ 8192) the per-step (rows, n_hops,
    # 256) f32 matmul output stops fitting comfortably in VMEM; the time axis
    # should then also be tiled with a one-hop-block carry.  Not needed here.

    out = pl.pallas_call(
        functools.partial(_scattering_kernel, rows=rows, n_hops=n_hops),
        out_shape=jax.ShapeDtypeStruct((N, n_frames, NBINS), jnp.float32),
        grid=grid,
        in_specs=[
            pl.BlockSpec((rows * n_hops, HOP), lambda i: (i, 0)),
            pl.BlockSpec((HOP, 4 * PADB), lambda i: (0, 0)),
        ],
        out_specs=pl.BlockSpec((rows, n_frames, NBINS), lambda i: (i, 0, 0)),
        compiler_params=pltpu.CompilerParams(
            dimension_semantics=("parallel",),
            vmem_limit_bytes=32 * 1024 * 1024,
        ),
    )(x_rows, dft)

    # Kernel already emits the final 33-bin layout; this reshape is metadata-only.
    return out.reshape(B, C, n_frames, NBINS)


def _reference(x):
    """Pure-JAX reference mirroring the PyTorch module."""
    B, C, T = x.shape
    x_pad = jnp.pad(x, ((0, 0), (0, 0), (0, WIN)))
    n_frames = T // HOP + 1
    idx = np.arange(n_frames)[:, None] * HOP + np.arange(WIN)[None, :]
    frames = x_pad[..., idx]  # (B, C, n_frames, WIN)
    spec = jnp.fft.rfft(frames, axis=-1, norm="ortho")
    return jnp.abs(spec).astype(jnp.float32)


if __name__ == "__main__":
    key = jax.random.PRNGKey(0)
    B, C, T = 2, 4, 256  # small audio-like input: (batch, channels, samples)
    x = jax.random.normal(key, (B, C, T), dtype=jnp.float32)

    out = jax.block_until_ready(scattering(x))
    ref = jax.block_until_ready(_reference(x))
    assert out.shape == ref.shape, (out.shape, ref.shape)
    np.testing.assert_allclose(np.asarray(out), np.asarray(ref),
                               atol=1e-4, rtol=1e-4)
    print("KERNEL_OK")
</pallas_src>

<mosaic_0001>
module attributes {stable_mosaic.version = 11 : i64} {
  func.func @_scattering_kernel(%arg0: i32, %arg1: memref<64x32xf32, #tpu.memory_space<vmem>>, %arg2: memref<32x256xf32, #tpu.memory_space<vmem>>, %arg3: memref<8x9x33xf32, #tpu.memory_space<vmem>>) attributes {dimension_semantics = [#tpu.dimension_semantics<parallel>], iteration_bounds = array<i64: 1>, scalar_prefetch = 0 : i64, scratch_operands = 0 : i64, tpu.core_type = #tpu.core_type<tc>, window_params = [{transform_indices = @transform_0, window_bounds = array<i64: 64, 32>}, {pipeline_mode = #tpu.pipeline_mode<synchronous>, transform_indices = @transform_1, window_bounds = array<i64: 32, 256>}, {transform_indices = @transform_2, window_bounds = array<i64: 8, 9, 33>}]} {
    %c0 = arith.constant 0 : index
    %c0_0 = arith.constant 0 : index
    %0 = vector.load %arg1[%c0, %c0_0] : memref<64x32xf32, #tpu.memory_space<vmem>>, vector<64x32xf32>
    %c0_1 = arith.constant 0 : index
    %c0_2 = arith.constant 0 : index
    %1 = vector.load %arg2[%c0_1, %c0_2] : memref<32x256xf32, #tpu.memory_space<vmem>>, vector<32x256xf32>
    %cst = arith.constant dense<0.000000e+00> : vector<64x256xf32>
    %2 = tpu.matmul %0, %1, %cst {dimension_numbers = #tpu.dot_dimension_numbers<[1], [0], [0], [1], [0, 0, 1, 1], [], []>} : vector<64x32xf32>, vector<32x256xf32>, vector<64x256xf32> -> vector<64x256xf32>
    %3 = vector.shape_cast %2 : vector<64x256xf32> to vector<8x8x256xf32>
    %4 = vector.extract_strided_slice %3 {offsets = [0, 0, 0], sizes = [8, 7, 128], strides = [1, 1, 1]} : vector<8x8x256xf32> to vector<8x7x128xf32>
    %5 = vector.extract_strided_slice %3 {offsets = [0, 1, 128], sizes = [8, 7, 128], strides = [1, 1, 1]} : vector<8x8x256xf32> to vector<8x7x128xf32>
    %6 = arith.addf %4, %5 : vector<8x7x128xf32>
    %7 = vector.extract_strided_slice %6 {offsets = [0, 0, 0], sizes = [8, 7, 33], strides = [1, 1, 1]} : vector<8x7x128xf32> to vector<8x7x33xf32>
    %8 = vector.extract_strided_slice %6 {offsets = [0, 0, 64], sizes = [8, 7, 33], strides = [1, 1, 1]} : vector<8x7x128xf32> to vector<8x7x33xf32>
    %9 = arith.mulf %7, %7 : vector<8x7x33xf32>
    %10 = arith.mulf %8, %8 : vector<8x7x33xf32>
    %11 = arith.addf %9, %10 : vector<8x7x33xf32>
    %12 = math.sqrt %11 : vector<8x7x33xf32>
    %c0_3 = arith.constant 0 : index
    %c0_4 = arith.constant 0 : index
    %c0_5 = arith.constant 0 : index
    %13 = vector.load %arg3[%c0_3, %c0_4, %c0_5] : memref<8x9x33xf32, #tpu.memory_space<vmem>>, vector<8x7x33xf32>
    tpu.vector_store %arg3[%c0_3, %c0_4, %c0_5], %12 {strides = array<i32>} : memref<8x9x33xf32, #tpu.memory_space<vmem>>, vector<8x7x33xf32>,
    %14 = vector.extract_strided_slice %3 {offsets = [0, 7, 0], sizes = [8, 1, 128], strides = [1, 1, 1]} : vector<8x8x256xf32> to vector<8x1x128xf32>
    %15 = vector.extract_strided_slice %14 {offsets = [0, 0, 0], sizes = [8, 1, 33], strides = [1, 1, 1]} : vector<8x1x128xf32> to vector<8x1x33xf32>
    %16 = vector.extract_strided_slice %14 {offsets = [0, 0, 64], sizes = [8, 1, 33], strides = [1, 1, 1]} : vector<8x1x128xf32> to vector<8x1x33xf32>
    %17 = arith.mulf %15, %15 : vector<8x1x33xf32>
    %18 = arith.mulf %16, %16 : vector<8x1x33xf32>
    %19 = arith.addf %17, %18 : vector<8x1x33xf32>
    %20 = math.sqrt %19 : vector<8x1x33xf32>
    %c0_6 = arith.constant 0 : index
    %c7 = arith.constant 7 : index
    %c0_7 = arith.constant 0 : index
    %21 = vector.load %arg3[%c0_6, %c7, %c0_7] : memref<8x9x33xf32, #tpu.memory_space<vmem>>, vector<8x1x33xf32>
    tpu.vector_store %arg3[%c0_6, %c7, %c0_7], %20 {strides = array<i32>} : memref<8x9x33xf32, #tpu.memory_space<vmem>>, vector<8x1x33xf32>,
    %cst_8 = arith.constant 0.000000e+00 : f32
    %22 = vector.broadcast %cst_8 : f32 to vector<8x1x33xf32>
    %c0_9 = arith.constant 0 : index
    %c8 = arith.constant 8 : index
    %c0_10 = arith.constant 0 : index
    %23 = vector.load %arg3[%c0_9, %c8, %c0_10] : memref<8x9x33xf32, #tpu.memory_space<vmem>>, vector<8x1x33xf32>
    tpu.vector_store %arg3[%c0_9, %c8, %c0_10], %22 {strides = array<i32>} : memref<8x9x33xf32, #tpu.memory_space<vmem>>, vector<8x1x33xf32>,
    return
  }
  func.func @transform_0(%arg0: i32) -> (i32, i32) {
    %c0_i32 = arith.constant 0 : i32
    %c0_i32_0 = arith.constant 0 : i32
    return %arg0, %c0_i32 : i32, i32
  }
  func.func @transform_1(%arg0: i32) -> (i32, i32) {
    %c0_i32 = arith.constant 0 : i32
    %c0_i32_0 = arith.constant 0 : i32
    %c0_i32_1 = arith.constant 0 : i32
    return %c0_i32, %c0_i32_0 : i32, i32
  }
  func.func @transform_2(%arg0: i32) -> (i32, i32, i32) {
    %c0_i32 = arith.constant 0 : i32
    %c0_i32_0 = arith.constant 0 : i32
    %c0_i32_1 = arith.constant 0 : i32
    return %arg0, %c0_i32, %c0_i32_0 : i32, i32, i32
  }
}

</mosaic_0001>

<llo_original>
// kernel: tpu_custom_call.1
$region0: #{tpu_custom_call.1}
  #allocation0 [shape = 'u32[]', space=smem, size = 0x4, offset = 0x4, fixed_abs, tag = 'smem constant byte address 0x4 - core index']
  #allocation1 [shape = 'u32[144,128]{1,0:T(1,128)}', space=vmem, size = 0x12000, scoped, tag = 'internal scratch']
  %s0 = inlined_call_operand.vmem [shape: f32[64,32], index: 0, kind: input, shape index: {}]
  %s1 = inlined_call_operand.vmem [shape: f32[32,256], index: 1, kind: input, shape index: {}]
  %s2 = inlined_call_operand.vmem [shape: f32[8,9,33], index: 2, kind: output, shape index: {}]
  %s3 = sld [smem:[#allocation0]]
  $region18: #{tpu_custom_call.1} parent=0
    _
  %s5 = ssub.s32 1, %s3
  %s6 = scalar_select 0, %s5, %s3
  // Predicated region
  $region2: #{tpu_custom_call.1} parent=0 // pred_check
    _
  $region3: #{tpu_custom_call.1} parent=0 // pred_check_branch
    %8 = sbr.rel (0) target = $region5
  $region4: #{tpu_custom_call.1} parent=0 // pred_region
    _
  $region5: #{tpu_custom_call.1} parent=0 // pred_fallthru
    _
  // Predicated region
  $region6: #{tpu_custom_call.1} parent=0 // pred_check
    _
  $region7: #{tpu_custom_call.1} parent=0 // pred_check_branch
    %10 = sbr.rel (0) target = $region9
  $region8: #{tpu_custom_call.1} parent=0 // pred_region
    _
  $region9: #{tpu_custom_call.1} parent=0 // pred_fallthru
    _
  %v11 = vld [vmem:[%s0] sm:$0xff]
  %v12 = vld [vmem:[%s0 + $0x8] sm:$0xff]
  %v13 = vld [vmem:[%s0 + $0x10] sm:$0xff]
  %v14 = vld [vmem:[%s0 + $0x18] sm:$0xff]
  %v15 = vld [vmem:[%s0 + $0x20] sm:$0xff]
  %v16 = vld [vmem:[%s0 + $0x28] sm:$0xff]
  %v17 = vld [vmem:[%s0 + $0x30] sm:$0xff]
  %v18 = vld [vmem:[%s0 + $0x38] sm:$0xff]
  %v19 = vld [vmem:[%s1] sm:$0xff]
  %v20 = vld [vmem:[%s1 + $0x8] sm:$0xff]
  %v21 = vld [vmem:[%s1 + $0x10] sm:$0xff]
  %v22 = vld [vmem:[%s1 + $0x18] sm:$0xff]
  %v23 = vld [vmem:[%s1 + $0x20] sm:$0xff]
  %v24 = vld [vmem:[%s1 + $0x28] sm:$0xff]
  %v25 = vld [vmem:[%s1 + $0x30] sm:$0xff]
  %v26 = vld [vmem:[%s1 + $0x38] sm:$0xff]
  %vm27 = vcmask 261120
  %v29 = vsel %vm27, %v11, 0
  %v32 = vsel %vm27, %v12, 0
  %v35 = vsel %vm27, %v13, 0
  %v38 = vsel %vm27, %v14, 0
  %v41 = vsel %vm27, %v15, 0
  %v44 = vsel %vm27, %v16, 0
  %v47 = vsel %vm27, %v17, 0
  %v50 = vsel %vm27, %v18, 0
  %52 = vmatprep.subr.mxu0 %v20
  %53 = vmatpush1.msra.mxu0 %v19
  %54 = vmatprep.subr.mxu0 %v22
  %55 = vmatpush1.msra.mxu0 %v21
  %56 = vmatprep.subr.mxu0 %v24
  %57 = vmatpush1.msra.mxu0 %v23
  %58 = vmatprep.subr.mxu0 %v26
  %59 = vmatpush1.msra.mxu0 %v25
  %60 = vmatprep.subr.mxu0 0.0
  %61 = vmatpush1.msra.mxu0 0.0
  %62 = vmatprep.subr.mxu0 0.0
  %63 = vmatpush1.msra.mxu0 0.0
  %64 = vmatprep.subr.mxu0 0.0
  %65 = vmatpush1.msra.mxu0 0.0
  %66 = vmatprep.subr.mxu0 0.0
  %67 = vmatpush1.msra.mxu0 0.0
  %68 = vmatprep.subr.mxu0 0.0
  %69 = vmatpush1.msra.mxu0 0.0
  %70 = vmatprep.subr.mxu0 0.0
  %71 = vmatpush1.msra.mxu0 0.0
  %72 = vmatprep.subr.mxu0 0.0
  %73 = vmatpush1.msra.mxu0 0.0
  %74 = vmatprep.subr.mxu0 0.0
  %75 = vmatpush1.msra.mxu0 0.0
  %76 = vmatprep.subr.mxu0 0.0
  %77 = vmatpush1.msra.mxu0 0.0
  %78 = vmatprep.subr.mxu0 0.0
  %79 = vmatpush1.msra.mxu0 0.0
  %80 = vmatprep.subr.mxu0 0.0
  %81 = vmatpush1.msra.mxu0 0.0
  %82 = vmatprep.subr.mxu0 0.0
  %83 = vmatpush1.msra.mxu0 0.0
  %84 = vmatprep.subr.mxu0 0.0
  %85 = vmatpush1.msra.mxu0 0.0
  %86 = vmatprep.subr.mxu0 0.0
  %87 = vmatpush1.msra.mxu0 0.0
  %88 = vmatprep.subr.mxu0 0.0
  %89 = vmatpush1.msra.mxu0 0.0
  %90 = vmatprep.subr.mxu0 0.0
  %91 = vmatpush1.msra.mxu0 0.0
  %92 = vmatprep.subr.mxu0 0.0
  %93 = vmatpush1.msra.mxu0 0.0
  %94 = vmatprep.subr.mxu0 0.0
  %95 = vmatpush1.msra.mxu0 0.0
  %96 = vmatprep.subr.mxu0 0.0
  %97 = vmatpush1.msra.mxu0 0.0
  %98 = vmatprep.subr.mxu0 0.0
  %99 = vmatpush1.msra.mxu0 0.0
  %100 = vmatprep.subr.mxu0 0.0
  %101 = vmatpush1.msra.mxu0 0.0
  %102 = vmatprep.subr.mxu0 0.0
  %103 = vmatpush1.msra.mxu0 0.0
  %104 = vmatprep.subr.mxu0 0.0
  %105 = vmatpush1.msra.mxu0 0.0
  %106 = vmatprep.subr.mxu0 0.0
  %107 = vmatpush1.msra.mxu0 0.0
  %108 = vmatprep.subr.mxu0 0.0
  %109 = vmatpush1.msra.mxu0 0.0
  %110 = vmatprep.subr.mxu0 0.0
  %111 = vmatpush1.msra.mxu0 0.0
  %112 = vmatprep.subr.mxu0 0.0
  %113 = vmatpush1.msra.mxu0 0.0
  %114 = vmatprep.subr.mxu0 0.0
  %115 = vmatpush1.msra.mxu0 0.0
  %116 = vmatprep.mubr.f32.mxu0 0.0
  %117 = vmatmul.mubr.f32.gmra.mrb[0].mxu0 %v29
  %v118 = vpop.f32.mrb[0].mxu0
  %v119 = vadd.f32 0.0, %v118
  %v120 = vpop.f32.mrb[0].mxu0
  %v121 = vadd.f32 0.0, %v120
  %122 = vmatprep.mubr.f32.mxu0 0.0
  %123 = vmatmul.mubr.f32.gmra.mrb[0].mxu0 %v32
  %v124 = vpop.f32.mrb[0].mxu0
  %v125 = vadd.f32 0.0, %v124
  %v126 = vpop.f32.mrb[0].mxu0
  %v127 = vadd.f32 0.0, %v126
  %128 = vmatprep.mubr.f32.mxu0 0.0
  %129 = vmatmul.mubr.f32.gmra.mrb[0].mxu0 %v35
  %v130 = vpop.f32.mrb[0].mxu0
  %v131 = vadd.f32 0.0, %v130
  %v132 = vpop.f32.mrb[0].mxu0
  %v133 = vadd.f32 0.0, %v132
  %134 = vmatprep.mubr.f32.mxu0 0.0
  %135 = vmatmul.mubr.f32.gmra.mrb[0].mxu0 %v38
  %v136 = vpop.f32.mrb[0].mxu0
  %v137 = vadd.f32 0.0, %v136
  %v138 = vpop.f32.mrb[0].mxu0
  %v139 = vadd.f32 0.0, %v138
  %140 = vmatprep.mubr.f32.mxu0 0.0
  %141 = vmatmul.mubr.f32.gmra.mrb[0].mxu0 %v41
  %v142 = vpop.f32.mrb[0].mxu0
  %v143 = vadd.f32 0.0, %v142
  %v144 = vpop.f32.mrb[0].mxu0
  %v145 = vadd.f32 0.0, %v144
  %146 = vmatprep.mubr.f32.mxu0 0.0
  %147 = vmatmul.mubr.f32.gmra.mrb[0].mxu0 %v44
  %v148 = vpop.f32.mrb[0].mxu0
  %v149 = vadd.f32 0.0, %v148
  %v150 = vpop.f32.mrb[0].mxu0
  %v151 = vadd.f32 0.0, %v150
  %152 = vmatprep.mubr.f32.mxu0 0.0
  %153 = vmatmul.mubr.f32.gmra.mrb[0].mxu0 %v47
  %v154 = vpop.f32.mrb[0].mxu0
  %v155 = vadd.f32 0.0, %v154
  %v156 = vpop.f32.mrb[0].mxu0
  %v157 = vadd.f32 0.0, %v156
  %158 = vmatprep.mubr.f32.mxu0 0.0
  %159 = vmatmul.mubr.f32.gmra.mrb[0].mxu0 %v50
  %v160 = vpop.f32.mrb[0].mxu0
  %v161 = vadd.f32 0.0, %v160
  %v162 = vpop.f32.mrb[0].mxu0
  %v163 = vadd.f32 0.0, %v162
  %164 = vdwg.mxu0
  %v173 = vrot.slane %v121, 1
  %v174 = vrot.slane %v127, 1
  %v175 = vrot.slane %v133, 1
  %v176 = vrot.slane %v139, 1
  %v177 = vrot.slane %v145, 1
  %v178 = vrot.slane %v151, 1
  %v179 = vrot.slane %v157, 1
  %v180 = vrot.slane %v163, 1
  %v189 = vadd.f32 %v119, %v173
  %v190 = vadd.f32 %v125, %v174
  %v191 = vadd.f32 %v131, %v175
  %v192 = vadd.f32 %v137, %v176
  %v193 = vadd.f32 %v143, %v177
  %v194 = vadd.f32 %v149, %v178
  %v195 = vadd.f32 %v155, %v179
  %v196 = vadd.f32 %v161, %v180
  %v197 = vmul.f32 %v189, %v189
  %v198 = vmul.f32 %v190, %v190
  %v199 = vmul.f32 %v191, %v191
  %v200 = vmul.f32 %v192, %v192
  %v201 = vmul.f32 %v193, %v193
  %v202 = vmul.f32 %v194, %v194
  %v203 = vmul.f32 %v195, %v195
  %v204 = vmul.f32 %v196, %v196
  %213 = vrot.lane.b32.xlu0 %v197, 64
  %v214 = vpop.permute.xlu0 %213
  %215 = vrot.lane.b32.xlu0 %v198, 64
  %v216 = vpop.permute.xlu0 %215
  %217 = vrot.lane.b32.xlu0 %v199, 64
  %v218 = vpop.permute.xlu0 %217
  %219 = vrot.lane.b32.xlu0 %v200, 64
  %v220 = vpop.permute.xlu0 %219
  %221 = vrot.lane.b32.xlu0 %v201, 64
  %v222 = vpop.permute.xlu0 %221
  %223 = vrot.lane.b32.xlu0 %v202, 64
  %v224 = vpop.permute.xlu0 %223
  %225 = vrot.lane.b32.xlu0 %v203, 64
  %v226 = vpop.permute.xlu0 %225
  %227 = vrot.lane.b32.xlu0 %v204, 64
  %v228 = vpop.permute.xlu0 %227
  %v237 = vadd.f32 %v197, %v214
  %v238 = vadd.f32 %v198, %v216
  %v239 = vadd.f32 %v199, %v218
  %v240 = vadd.f32 %v200, %v220
  %v241 = vadd.f32 %v201, %v222
  %v242 = vadd.f32 %v202, %v224
  %v243 = vadd.f32 %v203, %v226
  %v244 = vadd.f32 %v204, %v228
  %v245 = vrsqrt.pop %v237
  %v246 = vmul.f32 %v237, %v245
  %vm247 = vcmp.eq.f32.partialorder %v237, inf
  %v248 = vsel %vm247, %v237, %v246
  %vm249 = vcmp.eq.f32.partialorder %v237, 0.0
  %v250 = vand.u32 %v237, 2147483648
  %v251 = vsel %vm249, %v250, %v248
  %v252 = vrsqrt.pop %v238
  %v253 = vmul.f32 %v238, %v252
  %vm254 = vcmp.eq.f32.partialorder %v238, inf
  %v255 = vsel %vm254, %v238, %v253
  %vm256 = vcmp.eq.f32.partialorder %v238, 0.0
  %v257 = vand.u32 %v238, 2147483648
  %v258 = vsel %vm256, %v257, %v255
  %v259 = vrsqrt.pop %v239
  %v260 = vmul.f32 %v239, %v259
  %vm261 = vcmp.eq.f32.partialorder %v239, inf
  %v262 = vsel %vm261, %v239, %v260
  %vm263 = vcmp.eq.f32.partialorder %v239, 0.0
  %v264 = vand.u32 %v239, 2147483648
  %v265 = vsel %vm263, %v264, %v262
  %v266 = vrsqrt.pop %v240
  %v267 = vmul.f32 %v240, %v266
  %vm268 = vcmp.eq.f32.partialorder %v240, inf
  %v269 = vsel %vm268, %v240, %v267
  %vm270 = vcmp.eq.f32.partialorder %v240, 0.0
  %v271 = vand.u32 %v240, 2147483648
  %v272 = vsel %vm270, %v271, %v269
  %v273 = vrsqrt.pop %v241
  %v274 = vmul.f32 %v241, %v273
  %vm275 = vcmp.eq.f32.partialorder %v241, inf
  %v276 = vsel %vm275, %v241, %v274
  %vm277 = vcmp.eq.f32.partialorder %v241, 0.0
  %v278 = vand.u32 %v241, 2147483648
  %v279 = vsel %vm277, %v278, %v276
  %v280 = vrsqrt.pop %v242
  %v281 = vmul.f32 %v242, %v280
  %vm282 = vcmp.eq.f32.partialorder %v242, inf
  %v283 = vsel %vm282, %v242, %v281
  %vm284 = vcmp.eq.f32.partialorder %v242, 0.0
  %v285 = vand.u32 %v242, 2147483648
  %v286 = vsel %vm284, %v285, %v283
  %v287 = vrsqrt.pop %v243
  %v288 = vmul.f32 %v243, %v287
  %vm289 = vcmp.eq.f32.partialorder %v243, inf
  %v290 = vsel %vm289, %v243, %v288
  %vm291 = vcmp.eq.f32.partialorder %v243, 0.0
  %v292 = vand.u32 %v243, 2147483648
  %v293 = vsel %vm291, %v292, %v290
  %v294 = vrsqrt.pop %v244
  %v295 = vmul.f32 %v244, %v294
  %vm296 = vcmp.eq.f32.partialorder %v244, inf
  %v297 = vsel %vm296, %v244, %v295
  %vm298 = vcmp.eq.f32.partialorder %v244, 0.0
  %v299 = vand.u32 %v244, 2147483648
  %v300 = vsel %vm298, %v299, %v297
  %vm301 = vcmask 268288
  %302 = vst.msk [vmem:[%s2] sm:$0x7f] %vm301, %v251
  %303 = vst.msk [vmem:[%s2 + $0x10] sm:$0x7f] %vm301, %v258
  %304 = vst.msk [vmem:[%s2 + $0x20] sm:$0x7f] %vm301, %v265
  %305 = vst.msk [vmem:[%s2 + $0x30] sm:$0x7f] %vm301, %v272
  %306 = vst.msk [vmem:[%s2 + $0x40] sm:$0x7f] %vm301, %v279
  %307 = vst.msk [vmem:[%s2 + $0x50] sm:$0x7f] %vm301, %v286
  %308 = vst.msk [vmem:[%s2 + $0x60] sm:$0x7f] %vm301, %v293
  %309 = vst.msk [vmem:[%s2 + $0x70] sm:$0x7f] %vm301, %v300
  %v310 = vmul.f32 %v119, %v119
  %v311 = vmul.f32 %v125, %v125
  %v312 = vmul.f32 %v131, %v131
  %v313 = vmul.f32 %v137, %v137
  %v314 = vmul.f32 %v143, %v143
  %v315 = vmul.f32 %v149, %v149
  %v316 = vmul.f32 %v155, %v155
  %v317 = vmul.f32 %v161, %v161
  %326 = vrot.lane.b32.xlu0 %v310, 64
  %v327 = vpop.permute.xlu0 %326
  %328 = vrot.lane.b32.xlu0 %v311, 64
  %v329 = vpop.permute.xlu0 %328
  %330 = vrot.lane.b32.xlu0 %v312, 64
  %v331 = vpop.permute.xlu0 %330
  %332 = vrot.lane.b32.xlu0 %v313, 64
  %v333 = vpop.permute.xlu0 %332
  %334 = vrot.lane.b32.xlu0 %v314, 64
  %v335 = vpop.permute.xlu0 %334
  %336 = vrot.lane.b32.xlu0 %v315, 64
  %v337 = vpop.permute.xlu0 %336
  %338 = vrot.lane.b32.xlu0 %v316, 64
  %v339 = vpop.permute.xlu0 %338
  %340 = vrot.lane.b32.xlu0 %v317, 64
  %v341 = vpop.permute.xlu0 %340
  %v350 = vadd.f32 %v310, %v327
  %v351 = vadd.f32 %v311, %v329
  %v352 = vadd.f32 %v312, %v331
  %v353 = vadd.f32 %v313, %v333
  %v354 = vadd.f32 %v314, %v335
  %v355 = vadd.f32 %v315, %v337
  %v356 = vadd.f32 %v316, %v339
  %v357 = vadd.f32 %v317, %v341
  %v358 = vrsqrt.pop %v350
  %v359 = vmul.f32 %v350, %v358
  %vm360 = vcmp.eq.f32.partialorder %v350, inf
  %v361 = vsel %vm360, %v350, %v359
  %vm362 = vcmp.eq.f32.partialorder %v350, 0.0
  %v363 = vand.u32 %v350, 2147483648
  %v364 = vsel %vm362, %v363, %v361
  %v365 = vrsqrt.pop %v351
  %v366 = vmul.f32 %v351, %v365
  %vm367 = vcmp.eq.f32.partialorder %v351, inf
  %v368 = vsel %vm367, %v351, %v366
  %vm369 = vcmp.eq.f32.partialorder %v351, 0.0
  %v370 = vand.u32 %v351, 2147483648
  %v371 = vsel %vm369, %v370, %v368
  %v372 = vrsqrt.pop %v352
  %v373 = vmul.f32 %v352, %v372
  %vm374 = vcmp.eq.f32.partialorder %v352, inf
  %v375 = vsel %vm374, %v352, %v373
  %vm376 = vcmp.eq.f32.partialorder %v352, 0.0
  %v377 = vand.u32 %v352, 2147483648
  %v378 = vsel %vm376, %v377, %v375
  %v379 = vrsqrt.pop %v353
  %v380 = vmul.f32 %v353, %v379
  %vm381 = vcmp.eq.f32.partialorder %v353, inf
  %v382 = vsel %vm381, %v353, %v380
  %vm383 = vcmp.eq.f32.partialorder %v353, 0.0
  %v384 = vand.u32 %v353, 2147483648
  %v385 = vsel %vm383, %v384, %v382
  %v386 = vrsqrt.pop %v354
  %v387 = vmul.f32 %v354, %v386
  %vm388 = vcmp.eq.f32.partialorder %v354, inf
  %v389 = vsel %vm388, %v354, %v387
  %vm390 = vcmp.eq.f32.partialorder %v354, 0.0
  %v391 = vand.u32 %v354, 2147483648
  %v392 = vsel %vm390, %v391, %v389
  %v393 = vrsqrt.pop %v355
  %v394 = vmul.f32 %v355, %v393
  %vm395 = vcmp.eq.f32.partialorder %v355, inf
  %v396 = vsel %vm395, %v355, %v394
  %vm397 = vcmp.eq.f32.partialorder %v355, 0.0
  %v398 = vand.u32 %v355, 2147483648
  %v399 = vsel %vm397, %v398, %v396
  %v400 = vrsqrt.pop %v356
  %v401 = vmul.f32 %v356, %v400
  %vm402 = vcmp.eq.f32.partialorder %v356, inf
  %v403 = vsel %vm402, %v356, %v401
  %vm404 = vcmp.eq.f32.partialorder %v356, 0.0
  %v405 = vand.u32 %v356, 2147483648
  %v406 = vsel %vm404, %v405, %v403
  %v407 = vrsqrt.pop %v357
  %v408 = vmul.f32 %v357, %v407
  %vm409 = vcmp.eq.f32.partialorder %v357, inf
  %v410 = vsel %vm409, %v357, %v408
  %vm411 = vcmp.eq.f32.partialorder %v357, 0.0
  %v412 = vand.u32 %v357, 2147483648
  %v413 = vsel %vm411, %v412, %v410
  %vm414 = vcmask 269319
  %415 = vst.msk [vmem:[%s2] sm:$0x80] %vm414, %v364
  %416 = vst.msk [vmem:[%s2 + $0x10] sm:$0x80] %vm414, %v371
  %417 = vst.msk [vmem:[%s2 + $0x20] sm:$0x80] %vm414, %v378
  %418 = vst.msk [vmem:[%s2 + $0x30] sm:$0x80] %vm414, %v385
  %419 = vst.msk [vmem:[%s2 + $0x40] sm:$0x80] %vm414, %v392
  %420 = vst.msk [vmem:[%s2 + $0x50] sm:$0x80] %vm414, %v399
  %421 = vst.msk [vmem:[%s2 + $0x60] sm:$0x80] %vm414, %v406
  %422 = vst.msk [vmem:[%s2 + $0x70] sm:$0x80] %vm414, %v413
  %vm423 = vcmask 262144
  %424 = vst.msk [vmem:[%s2 + $0x8] sm:$0x1] %vm423, 0.0
  %425 = vst.msk [vmem:[%s2 + $0x18] sm:$0x1] %vm423, 0.0
  %426 = vst.msk [vmem:[%s2 + $0x28] sm:$0x1] %vm423, 0.0
  %427 = vst.msk [vmem:[%s2 + $0x38] sm:$0x1] %vm423, 0.0
  %428 = vst.msk [vmem:[%s2 + $0x48] sm:$0x1] %vm423, 0.0
  %429 = vst.msk [vmem:[%s2 + $0x58] sm:$0x1] %vm423, 0.0
  %430 = vst.msk [vmem:[%s2 + $0x68] sm:$0x1] %vm423, 0.0
  %431 = vst.msk [vmem:[%s2 + $0x78] sm:$0x1] %vm423, 0.0
  // Predicated region
  $region10: #{tpu_custom_call.1} parent=0 // pred_check
    _
  $region11: #{tpu_custom_call.1} parent=0 // pred_check_branch
    %433 = sbr.rel (0) target = $region13
  $region12: #{tpu_custom_call.1} parent=0 // pred_region
    _
  $region13: #{tpu_custom_call.1} parent=0 // pred_fallthru
    _
  // Predicated region
  $region14: #{tpu_custom_call.1} parent=0 // pred_check
    _
  $region15: #{tpu_custom_call.1} parent=0 // pred_check_branch
    %435 = sbr.rel (0) target = $region17
  $region16: #{tpu_custom_call.1} parent=0 // pred_region
    _
  $region17: #{tpu_custom_call.1} parent=0 // pred_fallthru
    _

</llo_original>
